<compile_context>
chip_gen: v5e
topology: v5e:2x2
jax: 0.10.0
libtpu: 0.0.40
codegen_flags: <defaults>
</compile_context>

<pallas_src>
import functools

import jax
import jax.numpy as jnp
from jax.experimental import pallas as pl
from jax.experimental.pallas import tpu as pltpu


def _round_up(x, m):
    return ((x + m - 1) // m) * m


# ---------------------------------------------------------------------------
# Kernel
# ---------------------------------------------------------------------------
def _fused_mlp_kernel(xs_ref, xe_ref, w_ref, b_ref, o_ref, *,
                      s_in, e_in, spad, epad, npad):
    """5-layer fused MLP on one (TB, ...) batch tile.

    xs_ref : (TB, s_in)                 f32   scalar features
    xe_ref : (TB, e_in)                 f32   embedding features
    w_ref  : (spad+epad+4*npad, npad)   bf16  packed weights (see pack_params)
    b_ref  : (8, npad)                  f32   packed biases (rows 0..4 used)
    o_ref  : (TB, npad)                 bf16  lane-dense output slab
    """
    f32 = jnp.float32
    bf16 = jnp.bfloat16

    # --- branch layer 1, fused column-wise:
    #     h = [xs @ w1s | xe @ w1e] + [b1s | b1e], ReLU
    h = jnp.dot(xs_ref[...].astype(bf16), w_ref[0:s_in, :],
                preferred_element_type=f32)
    h = h + jnp.dot(xe_ref[...].astype(bf16), w_ref[spad:spad + e_in, :],
                    preferred_element_type=f32)
    h = jnp.maximum(h + b_ref[0:1, :], 0.0)

    # --- branch layer 2: h @ blockdiag(w2s, w2e) + [b2s|b2e], ReLU
    off = spad + epad
    h = jnp.dot(h.astype(bf16), w_ref[off:off + npad, :],
                preferred_element_type=f32)
    h = jnp.maximum(h + b_ref[1:2, :], 0.0)   # == concat([scalar_out, emb_out])

    # --- combined layer 1 (wc1), ReLU
    off += npad
    h = jnp.dot(h.astype(bf16), w_ref[off:off + npad, :],
                preferred_element_type=f32)
    h = jnp.maximum(h + b_ref[2:3, :], 0.0)

    # --- combined layer 2 (wc2), ReLU
    off += npad
    h = jnp.dot(h.astype(bf16), w_ref[off:off + npad, :],
                preferred_element_type=f32)
    h = jnp.maximum(h + b_ref[3:4, :], 0.0)

    # --- combined output layer (wc3), no activation
    off += npad
    out = jnp.dot(h.astype(bf16), w_ref[off:off + npad, :],
                  preferred_element_type=f32)
    out = out + b_ref[4:5, :]

    o_ref[...] = out.astype(o_ref.dtype)      # bf16 store (lane-dense)


# ---------------------------------------------------------------------------
# Parameter packing (wrapper-side, pure JAX, done ONCE)
# ---------------------------------------------------------------------------
def pack_params(params):
    """Pack all weights into one bf16 slab and all biases into one f32 slab."""
    w1s, w1e = params["w1s"], params["w1e"]
    s_in, s_hid = w1s.shape
    e_in, e_hid = w1e.shape
    H = s_hid + e_hid
    C = params["wc2"].shape[0]
    out_dim = params["wc3"].shape[1]

    spad = _round_up(s_in, 8)
    epad = _round_up(e_in, 8)
    NP = _round_up(max(H, C, out_dim), 128)   # uniform padded lane width

    def blockdiag(a, b):
        ka, na = a.shape
        kb, nb = b.shape
        z = jnp.zeros((ka + kb, na + nb), jnp.float32)
        z = z.at[:ka, :na].set(a)
        z = z.at[ka:, na:].set(b)
        return z

    def pad_w(w, rows, cols, col_off=0):
        z = jnp.zeros((rows, cols), jnp.float32)
        return z.at[:w.shape[0], col_off:col_off + w.shape[1]].set(w)

    W1s = pad_w(w1s, spad, NP, col_off=0)      # xs row-block -> cols [0:S_hid)
    W1e = pad_w(w1e, epad, NP, col_off=s_hid)  # xe row-block -> cols [S_hid:H)
    W2 = pad_w(blockdiag(params["w2s"], params["w2e"]), NP, NP)
    W3 = pad_w(params["wc1"], NP, NP)
    W4 = pad_w(params["wc2"], NP, NP)
    W5 = pad_w(params["wc3"], NP, NP)
    wbuf = jnp.concatenate([W1s, W1e, W2, W3, W4, W5], axis=0).astype(jnp.bfloat16)

    def pad_b(b):
        return jnp.zeros((1, NP), jnp.float32).at[:, :b.shape[1]].set(b)

    bbuf = jnp.concatenate(
        [pad_b(jnp.concatenate([params["b1s"], params["b1e"]], axis=1)),
         pad_b(jnp.concatenate([params["b2s"], params["b2e"]], axis=1)),
         pad_b(params["bc1"]),
         pad_b(params["bc2"]),
         pad_b(params["bc3"]),
         jnp.zeros((3, NP), jnp.float32)],     # pad bias slab rows to 8 sublanes
        axis=0)

    dims = dict(s_in=s_in, e_in=e_in, spad=spad, epad=epad, npad=NP,
                out_dim=out_dim)
    return wbuf, bbuf, dims


# ---------------------------------------------------------------------------
# Batch-tile selection
# ---------------------------------------------------------------------------
def _choose_tile(B, block_b):
    """Pick a batch tile that amortizes per-step overhead but keeps >= 2 grid
    steps for mid/large batches (megacore sharding on v7x)."""
    B8 = _round_up(max(B, 8), 8)
    block_b = _round_up(max(block_b, 8), 8)    # defensive: keep multiple of 8
    if B8 > block_b:
        TB = block_b                           # grid >= 2 automatically
    elif B8 >= 512:
        TB = _round_up((B8 + 1) // 2, 8)       # split into 2 parallel steps
    else:
        TB = B8                                # tiny batch: single step
    Bp = _round_up(B8, TB)
    return TB, Bp


# ---------------------------------------------------------------------------
# Forward (packed params)
# ---------------------------------------------------------------------------
def _forward_packed(scalar_features, embedding_features, packed, block_b):
    wbuf, bbuf, dims = packed
    s_in, e_in = dims["s_in"], dims["e_in"]
    spad, epad, NP = dims["spad"], dims["epad"], dims["npad"]
    out_dim = dims["out_dim"]

    B = scalar_features.shape[0]
    TB, Bp = _choose_tile(B, block_b)

    xs = scalar_features
    xe = embedding_features
    if Bp != B:                                # zero-pad batch rows only
        xs = jnp.pad(xs, ((0, Bp - B), (0, 0)))
        xe = jnp.pad(xe, ((0, Bp - B), (0, 0)))

    kernel = functools.partial(_fused_mlp_kernel, s_in=s_in, e_in=e_in,
                               spad=spad, epad=epad, npad=NP)
    w_rows = spad + epad + 4 * NP

    out = pl.pallas_call(
        kernel,
        out_shape=jax.ShapeDtypeStruct((Bp, NP), jnp.bfloat16),
        grid=(Bp // TB,),
        in_specs=[
            pl.BlockSpec((TB, s_in), lambda i: (i, 0)),      # scalar features
            pl.BlockSpec((TB, e_in), lambda i: (i, 0)),      # embedding features
            pl.BlockSpec((w_rows, NP), lambda i: (0, 0)),    # weights, resident
            pl.BlockSpec((8, NP), lambda i: (0, 0)),         # biases, resident
        ],
        out_specs=pl.BlockSpec((TB, NP), lambda i: (i, 0)),
        compiler_params=pltpu.CompilerParams(
            dimension_semantics=("parallel",)),
    )(xs, xe, wbuf, bbuf)

    return out[:B, :out_dim].astype(jnp.float32)


def make_combined_model_forward(params, *, block_b=2048):
    """Pack params once and return a jitted forward closed over the slabs."""
    packed = pack_params(params)

    @jax.jit
    def forward(scalar_features, embedding_features):
        return _forward_packed(scalar_features, embedding_features, packed,
                               block_b)

    return forward


def combined_model_forward(scalar_features, embedding_features, params, *,
                           block_b=2048):
    """One-shot convenience wrapper (packs params every call; prefer
    make_combined_model_forward for repeated use)."""
    packed = pack_params(params)
    return _forward_packed(scalar_features, embedding_features, packed, block_b)


# ---------------------------------------------------------------------------
# Params + references
# ---------------------------------------------------------------------------
def init_params(key, scalar_input_dim, embedding_input_dim,
                scalar_mlp_hidden_dim, embedding_hidden_dim,
                combined_mlp_hidden_dim, output_dim):
    """PyTorch-style init. Weights stored (in_features, out_features)."""
    def linear(k, fan_in, fan_out):
        kw, kb = jax.random.split(k)
        bound = 1.0 / jnp.sqrt(jnp.float32(fan_in))
        w = jax.random.uniform(kw, (fan_in, fan_out), jnp.float32, -bound, bound)
        b = jax.random.uniform(kb, (1, fan_out), jnp.float32, -bound, bound)
        return w, b

    keys = jax.random.split(key, 7)
    p = {}
    p["w1s"], p["b1s"] = linear(keys[0], scalar_input_dim, scalar_mlp_hidden_dim)
    p["w2s"], p["b2s"] = linear(keys[1], scalar_mlp_hidden_dim, scalar_mlp_hidden_dim)
    p["w1e"], p["b1e"] = linear(keys[2], embedding_input_dim, embedding_hidden_dim)
    p["w2e"], p["b2e"] = linear(keys[3], embedding_hidden_dim, embedding_hidden_dim)
    p["wc1"], p["bc1"] = linear(
        keys[4], scalar_mlp_hidden_dim + embedding_hidden_dim, combined_mlp_hidden_dim)
    p["wc2"], p["bc2"] = linear(
        keys[5], combined_mlp_hidden_dim, combined_mlp_hidden_dim)
    p["wc3"], p["bc3"] = linear(keys[6], combined_mlp_hidden_dim, output_dim)
    return p


def reference_forward_f32(xs, xe, params):
    """Pure-JAX f32 reference matching the PyTorch forward exactly."""
    relu = jax.nn.relu
    so = relu(xs @ params["w1s"] + params["b1s"])
    so = relu(so @ params["w2s"] + params["b2s"])
    eo = relu(xe @ params["w1e"] + params["b1e"])
    eo = relu(eo @ params["w2e"] + params["b2e"])
    comb = jnp.concatenate([so, eo], axis=-1)
    c = relu(comb @ params["wc1"] + params["bc1"])
    c = relu(c @ params["wc2"] + params["bc2"])
    return c @ params["wc3"] + params["bc3"]


def reference_forward_bf16(xs, xe, params):
    """Reference emulating the kernel's bf16-matmul / f32-accumulate numerics
    (including the final bf16 output store)."""
    bf16, f32 = jnp.bfloat16, jnp.float32
    relu = jax.nn.relu

    def lin(x, w, b):
        return jnp.dot(x.astype(bf16), w.astype(bf16),
                       preferred_element_type=f32) + b

    so = relu(lin(xs, params["w1s"], params["b1s"]))
    so = relu(lin(so, params["w2s"], params["b2s"]))
    eo = relu(lin(xe, params["w1e"], params["b1e"]))
    eo = relu(lin(eo, params["w2e"], params["b2e"]))
    comb = jnp.concatenate([so, eo], axis=-1)
    c = relu(lin(comb, params["wc1"], params["bc1"]))
    c = relu(lin(c, params["wc2"], params["bc2"]))
    out = lin(c, params["wc3"], params["bc3"])
    return out.astype(bf16).astype(f32)


# ---------------------------------------------------------------------------
if __name__ == "__main__":
    # Small, forward-consistent shapes.
    B = 8
    scalar_input_dim = 8
    embedding_input_dim = 32
    scalar_mlp_hidden_dim = 32
    embedding_hidden_dim = 32
    combined_mlp_hidden_dim = 64
    output_dim = 4

    key = jax.random.PRNGKey(0)
    kp, ks, ke, ks2, ke2 = jax.random.split(key, 5)

    params = init_params(kp, scalar_input_dim, embedding_input_dim,
                         scalar_mlp_hidden_dim, embedding_hidden_dim,
                         combined_mlp_hidden_dim, output_dim)
    fwd = make_combined_model_forward(params)   # pack once, jit once

    # --- tiny batch (single grid step) ---
    scalar_features = jax.random.normal(ks, (B, scalar_input_dim), jnp.float32)
    embedding_features = jax.random.normal(ke, (B, embedding_input_dim), jnp.float32)

    out = jax.block_until_ready(fwd(scalar_features, embedding_features))
    assert out.shape == (B, output_dim)

    ref_bf16 = reference_forward_bf16(scalar_features, embedding_features, params)
    assert jnp.allclose(out, ref_bf16, atol=2e-2, rtol=2e-2), (
        float(jnp.max(jnp.abs(out - ref_bf16))))
    ref_f32 = reference_forward_f32(scalar_features, embedding_features, params)
    assert jnp.allclose(out, ref_f32, atol=6e-2, rtol=6e-2), (
        float(jnp.max(jnp.abs(out - ref_f32))))

    # --- mid batch (exercises 2-step grid + batch-row padding path) ---
    B2 = 520
    xs2 = jax.random.normal(ks2, (B2, scalar_input_dim), jnp.float32)
    xe2 = jax.random.normal(ke2, (B2, embedding_input_dim), jnp.float32)
    out2 = jax.block_until_ready(fwd(xs2, xe2))
    assert out2.shape == (B2, output_dim)
    ref2 = reference_forward_bf16(xs2, xe2, params)
    assert jnp.allclose(out2, ref2, atol=2e-2, rtol=2e-2), (
        float(jnp.max(jnp.abs(out2 - ref2))))

    print("KERNEL_OK")
</pallas_src>

<mosaic_0001>
module attributes {stable_mosaic.version = 11 : i64} {
  func.func @_fused_mlp_kernel(%arg0: i32, %arg1: memref<8x8xf32, #tpu.memory_space<vmem>>, %arg2: memref<8x32xf32, #tpu.memory_space<vmem>>, %arg3: memref<552x128xbf16, #tpu.memory_space<vmem>>, %arg4: memref<8x128xf32, #tpu.memory_space<vmem>>, %arg5: memref<8x128xbf16, #tpu.memory_space<vmem>>) attributes {dimension_semantics = [#tpu.dimension_semantics<parallel>], iteration_bounds = array<i64: 1>, scalar_prefetch = 0 : i64, scratch_operands = 0 : i64, tpu.core_type = #tpu.core_type<tc>, window_params = [{transform_indices = @transform_0, window_bounds = array<i64: 8, 8>}, {transform_indices = @transform_1, window_bounds = array<i64: 8, 32>}, {pipeline_mode = #tpu.pipeline_mode<synchronous>, transform_indices = @transform_2, window_bounds = array<i64: 552, 128>}, {pipeline_mode = #tpu.pipeline_mode<synchronous>, transform_indices = @transform_3, window_bounds = array<i64: 8, 128>}, {transform_indices = @transform_4, window_bounds = array<i64: 8, 128>}]} {
    %c0 = arith.constant 0 : index
    %c0_0 = arith.constant 0 : index
    %0 = vector.load %arg1[%c0, %c0_0] : memref<8x8xf32, #tpu.memory_space<vmem>>, vector<8x8xf32>
    %1 = arith.truncf %0 : vector<8x8xf32> to vector<8x8xbf16>
    %c0_1 = arith.constant 0 : index
    %c0_2 = arith.constant 0 : index
    %2 = vector.load %arg3[%c0_1, %c0_2] : memref<552x128xbf16, #tpu.memory_space<vmem>>, vector<8x128xbf16>
    %cst = arith.constant dense<0.000000e+00> : vector<8x128xf32>
    %3 = tpu.matmul %1, %2, %cst {dimension_numbers = #tpu.dot_dimension_numbers<[1], [0], [0], [1], [0, 0, 1, 1], [], []>} : vector<8x8xbf16>, vector<8x128xbf16>, vector<8x128xf32> -> vector<8x128xf32>
    %c0_3 = arith.constant 0 : index
    %c0_4 = arith.constant 0 : index
    %4 = vector.load %arg2[%c0_3, %c0_4] : memref<8x32xf32, #tpu.memory_space<vmem>>, vector<8x32xf32>
    %5 = arith.truncf %4 : vector<8x32xf32> to vector<8x32xbf16>
    %c8 = arith.constant 8 : index
    %c0_5 = arith.constant 0 : index
    %6 = vector.load %arg3[%c8, %c0_5] : memref<552x128xbf16, #tpu.memory_space<vmem>>, vector<32x128xbf16>
    %cst_6 = arith.constant dense<0.000000e+00> : vector<8x128xf32>
    %7 = tpu.matmul %5, %6, %cst_6 {dimension_numbers = #tpu.dot_dimension_numbers<[1], [0], [0], [1], [0, 0, 1, 1], [], []>} : vector<8x32xbf16>, vector<32x128xbf16>, vector<8x128xf32> -> vector<8x128xf32>
    %8 = arith.addf %3, %7 : vector<8x128xf32>
    %c0_7 = arith.constant 0 : index
    %c0_8 = arith.constant 0 : index
    %9 = vector.load %arg4[%c0_7, %c0_8] : memref<8x128xf32, #tpu.memory_space<vmem>>, vector<1x128xf32>
    %10 = vector.broadcast %9 : vector<1x128xf32> to vector<8x128xf32>
    %11 = arith.addf %8, %10 : vector<8x128xf32>
    %cst_9 = arith.constant 0.000000e+00 : f32
    %12 = vector.broadcast %cst_9 : f32 to vector<8x128xf32>
    %13 = arith.maximumf %11, %12 : vector<8x128xf32>
    %14 = arith.truncf %13 : vector<8x128xf32> to vector<8x128xbf16>
    %c40 = arith.constant 40 : index
    %c0_10 = arith.constant 0 : index
    %15 = vector.load %arg3[%c40, %c0_10] : memref<552x128xbf16, #tpu.memory_space<vmem>>, vector<128x128xbf16>
    %cst_11 = arith.constant dense<0.000000e+00> : vector<8x128xf32>
    %16 = tpu.matmul %14, %15, %cst_11 {dimension_numbers = #tpu.dot_dimension_numbers<[1], [0], [0], [1], [0, 0, 1, 1], [], []>} : vector<8x128xbf16>, vector<128x128xbf16>, vector<8x128xf32> -> vector<8x128xf32>
    %c1 = arith.constant 1 : index
    %c0_12 = arith.constant 0 : index
    %17 = vector.load %arg4[%c1, %c0_12] : memref<8x128xf32, #tpu.memory_space<vmem>>, vector<1x128xf32>
    %18 = vector.broadcast %17 : vector<1x128xf32> to vector<8x128xf32>
    %19 = arith.addf %16, %18 : vector<8x128xf32>
    %cst_13 = arith.constant 0.000000e+00 : f32
    %20 = vector.broadcast %cst_13 : f32 to vector<8x128xf32>
    %21 = arith.maximumf %19, %20 : vector<8x128xf32>
    %22 = arith.truncf %21 : vector<8x128xf32> to vector<8x128xbf16>
    %c168 = arith.constant 168 : index
    %c0_14 = arith.constant 0 : index
    %23 = vector.load %arg3[%c168, %c0_14] : memref<552x128xbf16, #tpu.memory_space<vmem>>, vector<128x128xbf16>
    %cst_15 = arith.constant dense<0.000000e+00> : vector<8x128xf32>
    %24 = tpu.matmul %22, %23, %cst_15 {dimension_numbers = #tpu.dot_dimension_numbers<[1], [0], [0], [1], [0, 0, 1, 1], [], []>} : vector<8x128xbf16>, vector<128x128xbf16>, vector<8x128xf32> -> vector<8x128xf32>
    %c2 = arith.constant 2 : index
    %c0_16 = arith.constant 0 : index
    %25 = vector.load %arg4[%c2, %c0_16] : memref<8x128xf32, #tpu.memory_space<vmem>>, vector<1x128xf32>
    %26 = vector.broadcast %25 : vector<1x128xf32> to vector<8x128xf32>
    %27 = arith.addf %24, %26 : vector<8x128xf32>
    %cst_17 = arith.constant 0.000000e+00 : f32
    %28 = vector.broadcast %cst_17 : f32 to vector<8x128xf32>
    %29 = arith.maximumf %27, %28 : vector<8x128xf32>
    %30 = arith.truncf %29 : vector<8x128xf32> to vector<8x128xbf16>
    %c296 = arith.constant 296 : index
    %c0_18 = arith.constant 0 : index
    %31 = vector.load %arg3[%c296, %c0_18] : memref<552x128xbf16, #tpu.memory_space<vmem>>, vector<128x128xbf16>
    %cst_19 = arith.constant dense<0.000000e+00> : vector<8x128xf32>
    %32 = tpu.matmul %30, %31, %cst_19 {dimension_numbers = #tpu.dot_dimension_numbers<[1], [0], [0], [1], [0, 0, 1, 1], [], []>} : vector<8x128xbf16>, vector<128x128xbf16>, vector<8x128xf32> -> vector<8x128xf32>
    %c3 = arith.constant 3 : index
    %c0_20 = arith.constant 0 : index
    %33 = vector.load %arg4[%c3, %c0_20] : memref<8x128xf32, #tpu.memory_space<vmem>>, vector<1x128xf32>
    %34 = vector.broadcast %33 : vector<1x128xf32> to vector<8x128xf32>
    %35 = arith.addf %32, %34 : vector<8x128xf32>
    %cst_21 = arith.constant 0.000000e+00 : f32
    %36 = vector.broadcast %cst_21 : f32 to vector<8x128xf32>
    %37 = arith.maximumf %35, %36 : vector<8x128xf32>
    %38 = arith.truncf %37 : vector<8x128xf32> to vector<8x128xbf16>
    %c424 = arith.constant 424 : index
    %c0_22 = arith.constant 0 : index
    %39 = vector.load %arg3[%c424, %c0_22] : memref<552x128xbf16, #tpu.memory_space<vmem>>, vector<128x128xbf16>
    %cst_23 = arith.constant dense<0.000000e+00> : vector<8x128xf32>
    %40 = tpu.matmul %38, %39, %cst_23 {dimension_numbers = #tpu.dot_dimension_numbers<[1], [0], [0], [1], [0, 0, 1, 1], [], []>} : vector<8x128xbf16>, vector<128x128xbf16>, vector<8x128xf32> -> vector<8x128xf32>
    %c4 = arith.constant 4 : index
    %c0_24 = arith.constant 0 : index
    %41 = vector.load %arg4[%c4, %c0_24] : memref<8x128xf32, #tpu.memory_space<vmem>>, vector<1x128xf32>
    %42 = vector.broadcast %41 : vector<1x128xf32> to vector<8x128xf32>
    %43 = arith.addf %40, %42 : vector<8x128xf32>
    %44 = arith.truncf %43 : vector<8x128xf32> to vector<8x128xbf16>
    %c0_25 = arith.constant 0 : index
    %c0_26 = arith.constant 0 : index
    %45 = vector.load %arg5[%c0_25, %c0_26] : memref<8x128xbf16, #tpu.memory_space<vmem>>, vector<8x128xbf16>
    tpu.vector_store %arg5[%c0_25, %c0_26], %44 {strides = array<i32>} : memref<8x128xbf16, #tpu.memory_space<vmem>>, vector<8x128xbf16>,
    return
  }
  func.func @transform_0(%arg0: i32) -> (i32, i32) {
    %c0_i32 = arith.constant 0 : i32
    %c0_i32_0 = arith.constant 0 : i32
    return %arg0, %c0_i32 : i32, i32
  }
  func.func @transform_1(%arg0: i32) -> (i32, i32) {
    %c0_i32 = arith.constant 0 : i32
    %c0_i32_0 = arith.constant 0 : i32
    return %arg0, %c0_i32 : i32, i32
  }
  func.func @transform_2(%arg0: i32) -> (i32, i32) {
    %c0_i32 = arith.constant 0 : i32
    %c0_i32_0 = arith.constant 0 : i32
    %c0_i32_1 = arith.constant 0 : i32
    return %c0_i32, %c0_i32_0 : i32, i32
  }
  func.func @transform_3(%arg0: i32) -> (i32, i32) {
    %c0_i32 = arith.constant 0 : i32
    %c0_i32_0 = arith.constant 0 : i32
    %c0_i32_1 = arith.constant 0 : i32
    return %c0_i32, %c0_i32_0 : i32, i32
  }
  func.func @transform_4(%arg0: i32) -> (i32, i32) {
    %c0_i32 = arith.constant 0 : i32
    %c0_i32_0 = arith.constant 0 : i32
    return %arg0, %c0_i32 : i32, i32
  }
}

</mosaic_0001>

<llo_original>
// kernel: forward.1
$region0: #{forward.1}
  #allocation0 [shape = 'u32[]', space=smem, size = 0x4, offset = 0x4, fixed_abs, tag = 'smem constant byte address 0x4 - core index']
  #allocation1 [shape = 'u32[72,128]{1,0:T(1,128)}', space=vmem, size = 0x9000, scoped, tag = 'internal scratch']
  %s0 = inlined_call_operand.hbm [shape: f32[8,8], index: 0, kind: input, shape index: {}]
  %s1 = inlined_call_operand.hbm [shape: f32[8,32], index: 1, kind: input, shape index: {}]
  %s2 = inlined_call_operand.hbm [shape: bf16[552,128], index: 2, kind: input, shape index: {}]
  %s3 = inlined_call_operand.hbm [shape: f32[8,128], index: 3, kind: input, shape index: {}]
  %s4 = inlined_call_operand.vmem [shape: bf16[8,128], index: 4, kind: output, shape index: {}]
  %s5 = sld [smem:[#allocation0]]
  $region42: #{forward.1} parent=0
    _
  %s7 = ssub.s32 1, %s5
  %s8 = scalar_select 0, %s7, %s5
  $region1: #{forward.1} parent=0
    #allocation2 [shape = 'u8[4096]{0}', space=vmem, size = 0x1000, scoped, tag = 'input window, operand 0, single buffered']
    #allocation3 [shape = 's32[1]{0}', space=sflag, size = 0x4, scoped, tag = 'scoped memory for forward.1']
    #allocation4 [shape = 'u8[4096]{0}', space=vmem, size = 0x1000, scoped, tag = 'input window, operand 1, single buffered']
    #allocation5 [shape = 's32[1]{0}', space=sflag, size = 0x4, scoped, tag = 'scoped memory for forward.1']
    #allocation6 [shape = 'u8[141312]{0}', space=vmem, size = 0x22800, scoped, tag = 'input window, operand 2, single buffered']
    #allocation7 [shape = 'u8[4096]{0}', space=vmem, size = 0x1000, scoped, tag = 'input window, operand 3, single buffered']
    #allocation8 [shape = 's32[1]{0}', space=sflag, size = 0x4, scoped, tag = 'scoped memory for forward.1']
    %9 = vsyncpa [#allocation3], 0
    %10 = vsyncpa [#allocation5], 0
    %11 = vsyncpa [#allocation8], 0
    // Predicated region
    $region2: #{forward.1} parent=1 // pred_check
      _
    $region3: #{forward.1} parent=1 // pred_check_branch
      %13 = sbr.rel (0) target = $region5
    $region4: #{forward.1} parent=1 // pred_region
      %15 = vsyncadd [#allocation3], 0
      %s17 = sshll.u32 %s0, 4
      %s18 = int_to_ptr.hbm [resolvable:$true] %s17
      %s19 = sshll.u32 [#allocation2], 4
      %s20 = int_to_ptr.vmem [resolvable:$true] %s19
      %22 = dma.hbm_to_vmem [thread:$0]  %s18, 128, %s20, [#allocation3]
    $region5: #{forward.1} parent=1 // pred_fallthru
      _
    // Predicated region
    $region6: #{forward.1} parent=1 // pred_check
      _
    $region7: #{forward.1} parent=1 // pred_check_branch
      %24 = sbr.rel (0) target = $region9
    $region8: #{forward.1} parent=1 // pred_region
      %26 = vsyncadd [#allocation5], 0
      %s28 = sshll.u32 %s1, 4
      %s29 = int_to_ptr.hbm [resolvable:$true] %s28
      %s30 = sshll.u32 [#allocation4], 4
      %s31 = int_to_ptr.vmem [resolvable:$true] %s30
      %33 = dma.hbm_to_vmem [thread:$0]  %s29, 128, %s31, [#allocation5]
    $region9: #{forward.1} parent=1 // pred_fallthru
      _
    // Predicated region
    $region10: #{forward.1} parent=1 // pred_check
      _
    $region11: #{forward.1} parent=1 // pred_check_branch
      %35 = sbr.rel (0) target = $region13
    $region12: #{forward.1} parent=1 // pred_region
      %37 = vsyncadd [#allocation5], 0
      %s38 = sshll.u32 %s2, 4
      %s39 = int_to_ptr.hbm [resolvable:$true] %s38
      %s40 = sshll.u32 [#allocation6], 4
      %s41 = int_to_ptr.vmem [resolvable:$true] %s40
      %46 = dma.hbm_to_vmem [thread:$0]  %s39, 4416, %s41, [#allocation5], 64, 64, 4
    $region13: #{forward.1} parent=1 // pred_fallthru
      _
    // Predicated region
    $region14: #{forward.1} parent=1 // pred_check
      _
    $region15: #{forward.1} parent=1 // pred_check_branch
      %48 = sbr.rel (0) target = $region17
    $region16: #{forward.1} parent=1 // pred_region
      %50 = vsyncadd [#allocation8], 0
      %s52 = sshll.u32 %s3, 4
      %s53 = int_to_ptr.hbm [resolvable:$true] %s52
      %s54 = sshll.u32 [#allocation7], 4
      %s55 = int_to_ptr.vmem [resolvable:$true] %s54
      %57 = dma.hbm_to_vmem [thread:$0]  %s53, 128, %s55, [#allocation8]
    $region17: #{forward.1} parent=1 // pred_fallthru
      _
    // Predicated region
    $region18: #{forward.1} parent=1 // pred_check
      _
    $region19: #{forward.1} parent=1 // pred_check_branch
      %59 = sbr.rel (0) target = $region21
    $region20: #{forward.1} parent=1 // pred_region
      %61 = dma.done [#allocation3], 128
    $region21: #{forward.1} parent=1 // pred_fallthru
      _
    // Predicated region
    $region22: #{forward.1} parent=1 // pred_check
      _
    $region23: #{forward.1} parent=1 // pred_check_branch
      %63 = sbr.rel (0) target = $region25
    $region24: #{forward.1} parent=1 // pred_region
      %65 = dma.done [#allocation5], 128
    $region25: #{forward.1} parent=1 // pred_fallthru
      _
    // Predicated region
    $region26: #{forward.1} parent=1 // pred_check
      _
    $region27: #{forward.1} parent=1 // pred_check_branch
      %67 = sbr.rel (0) target = $region29
    $region28: #{forward.1} parent=1 // pred_region
      %69 = dma.done [#allocation5], 4416
    $region29: #{forward.1} parent=1 // pred_fallthru
      _
    // Predicated region
    $region30: #{forward.1} parent=1 // pred_check
      _
    $region31: #{forward.1} parent=1 // pred_check_branch
      %71 = sbr.rel (0) target = $region33
    $region32: #{forward.1} parent=1 // pred_region
      %73 = dma.done [#allocation8], 128
    $region33: #{forward.1} parent=1 // pred_fallthru
      _
    %v75 = vld [vmem:[#allocation2] sm:$0xff]
    %v76 = vpack.c.bf16 %v75, %v75
    %v77 = vld [vmem:[#allocation6] sm:$0xf]
    %v78 = vld [vmem:[#allocation4] sm:$0xff]
    %v79 = vpack.c.bf16 %v78, %v78
    %v80 = vld [vmem:[#allocation6 + $0x4] sm:$0xf]
    %v81 = vld [vmem:[#allocation6 + $0x8] sm:$0xf]
    %v82 = vld [vmem:[#allocation6 + $0xc] sm:$0xf]
    %v83 = vld [vmem:[#allocation6 + $0x10] sm:$0xf]
    %v88 = vunpack.c.l.b16 %v80
    %v89 = vunpack.c.l.b16 %v81
    %v90 = vunpack.c.l.b16 %v82
    %v91 = vunpack.c.l.b16 %v83
    %v92 = vpack.c.b16 %v89, %v88
    %v93 = vpack.c.b16 %v91, %v90
    %vm96 = vcmask 261120
    %v98 = vsel %vm96, %v79, 0
    %100 = vmatpush.bf16.msra.mxu0 0
    %101 = vmatpush.bf16.msra.mxu0 0
    %102 = vmatpush.bf16.msra.mxu0 0
    %103 = vmatpush.bf16.msra.mxu0 0
    %104 = vmatpush.bf16.msra.mxu0 0
    %105 = vmatpush.bf16.msra.mxu0 0
    %106 = vmatpush.bf16.msra.mxu0 %v93
    %107 = vmatpush.bf16.msra.mxu0 %v92
    %108 = vmatmul.bf16.gmra.mxu0 %v98
    %v109 = vpop.f32.mrf.mxu0
    %v110 = vadd.f32 0.0, %v109
    %v111 = vpop.f32.mrf.mxu0
    %112 = vdwg.mxu0
    %vm113 = vcmask 64512
    %v115 = vsel %vm113, %v76, 0
    %vm117 = vcmask 1043456
    %v119 = vsel %vm117, %v77, 0
    %121 = vmatpush.bf16.msra.mxu0 0
    %122 = vmatpush.bf16.msra.mxu0 0
    %123 = vmatpush.bf16.msra.mxu0 0
    %124 = vmatpush.bf16.msra.mxu0 0
    %125 = vmatpush.bf16.msra.mxu0 0
    %126 = vmatpush.bf16.msra.mxu0 0
    %127 = vmatpush.bf16.msra.mxu0 0
    %128 = vmatpush.bf16.msra.mxu0 %v119
    %129 = vmatmul.bf16.gmra.mxu0 %v115
    %v130 = vpop.f32.mrf.mxu0
    %v131 = vadd.f32 %v110, %v130
    %v132 = vpop.f32.mrf.mxu0
    %133 = vdwg.mxu0
    %v134 = vld [vmem:[#allocation7] sm:$0x1]
    %v135 = vperm.slane %v134, 0
    %v136 = vadd.f32 %v131, %v135
    %v137 = vmax.f32 %v136, 0.0
    %v138 = vpack.c.bf16 %v137, %v137
    %v139 = vld [vmem:[#allocation6 + $0x14] sm:$0xf]
    %v140 = vld [vmem:[#allocation6 + $0x18] sm:$0xf]
    %v141 = vld [vmem:[#allocation6 + $0x1c] sm:$0xf]
    %v142 = vld [vmem:[#allocation6 + $0x20] sm:$0xf]
    %v143 = vld [vmem:[#allocation6 + $0x24] sm:$0xf]
    %v144 = vld [vmem:[#allocation6 + $0x28] sm:$0xf]
    %v145 = vld [vmem:[#allocation6 + $0x2c] sm:$0xf]
    %v146 = vld [vmem:[#allocation6 + $0x30] sm:$0xf]
    %v147 = vld [vmem:[#allocation6 + $0x34] sm:$0xf]
    %v148 = vld [vmem:[#allocation6 + $0x38] sm:$0xf]
    %v149 = vld [vmem:[#allocation6 + $0x3c] sm:$0xf]
    %v150 = vld [vmem:[#allocation6 + $0x40] sm:$0xf]
    %v151 = vld [vmem:[#allocation6 + $0x44] sm:$0xf]
    %v152 = vld [vmem:[#allocation6 + $0x48] sm:$0xf]
    %v153 = vld [vmem:[#allocation6 + $0x4c] sm:$0xf]
    %v154 = vld [vmem:[#allocation6 + $0x50] sm:$0xf]
    %v155 = vld [vmem:[#allocation7 + $0x1] sm:$0x1]
    %v156 = vperm.slane %v155, 0
    %v173 = vunpack.c.l.b16 %v139
    %v174 = vunpack.c.l.b16 %v140
    %v175 = vunpack.c.l.b16 %v141
    %v176 = vunpack.c.l.b16 %v142
    %v177 = vunpack.c.l.b16 %v143
    %v178 = vunpack.c.l.b16 %v144
    %v179 = vunpack.c.l.b16 %v145
    %v180 = vunpack.c.l.b16 %v146
    %v181 = vunpack.c.l.b16 %v147
    %v182 = vunpack.c.l.b16 %v148
    %v183 = vunpack.c.l.b16 %v149
    %v184 = vunpack.c.l.b16 %v150
    %v185 = vunpack.c.l.b16 %v151
    %v186 = vunpack.c.l.b16 %v152
    %v187 = vunpack.c.l.b16 %v153
    %v188 = vunpack.c.l.b16 %v154
    %v189 = vpack.c.b16 %v174, %v173
    %v190 = vpack.c.b16 %v176, %v175
    %v191 = vpack.c.b16 %v178, %v177
    %v192 = vpack.c.b16 %v180, %v179
    %v193 = vpack.c.b16 %v182, %v181
    %v194 = vpack.c.b16 %v184, %v183
    %v195 = vpack.c.b16 %v186, %v185
    %v196 = vpack.c.b16 %v188, %v187
    %205 = vmatpush.bf16.msra.mxu0 %v196
    %206 = vmatpush.bf16.msra.mxu0 %v195
    %207 = vmatpush.bf16.msra.mxu0 %v194
    %208 = vmatpush.bf16.msra.mxu0 %v193
    %209 = vmatpush.bf16.msra.mxu0 %v192
    %210 = vmatpush.bf16.msra.mxu0 %v191
    %211 = vmatpush.bf16.msra.mxu0 %v190
    %212 = vmatpush.bf16.msra.mxu0 %v189
    %213 = vmatmul.bf16.gmra.mxu0 %v138
    %v214 = vpop.f32.mrf.mxu0
    %v215 = vadd.f32 %v156, %v214
    %v216 = vpop.f32.mrf.mxu0
    %217 = vdwg.mxu0
    %v218 = vmax.f32 %v215, 0.0
    %v219 = vpack.c.bf16 %v218, %v218
    %v220 = vld [vmem:[#allocation6 + $0x54] sm:$0xf]
    %v221 = vld [vmem:[#allocation6 + $0x58] sm:$0xf]
    %v222 = vld [vmem:[#allocation6 + $0x5c] sm:$0xf]
    %v223 = vld [vmem:[#allocation6 + $0x60] sm:$0xf]
    %v224 = vld [vmem:[#allocation6 + $0x64] sm:$0xf]
    %v225 = vld [vmem:[#allocation6 + $0x68] sm:$0xf]
    %v226 = vld [vmem:[#allocation6 + $0x6c] sm:$0xf]
    %v227 = vld [vmem:[#allocation6 + $0x70] sm:$0xf]
    %v228 = vld [vmem:[#allocation6 + $0x74] sm:$0xf]
    %v229 = vld [vmem:[#allocation6 + $0x78] sm:$0xf]
    %v230 = vld [vmem:[#allocation6 + $0x7c] sm:$0xf]
    %v231 = vld [vmem:[#allocation6 + $0x80] sm:$0xf]
    %v232 = vld [vmem:[#allocation6 + $0x84] sm:$0xf]
    %v233 = vld [vmem:[#allocation6 + $0x88] sm:$0xf]
    %v234 = vld [vmem:[#allocation6 + $0x8c] sm:$0xf]
    %v235 = vld [vmem:[#allocation6 + $0x90] sm:$0xf]
    %v236 = vld [vmem:[#allocation7 + $0x2] sm:$0x1]
    %v237 = vperm.slane %v236, 0
    %v254 = vunpack.c.l.b16 %v220
    %v255 = vunpack.c.l.b16 %v221
    %v256 = vunpack.c.l.b16 %v222
    %v257 = vunpack.c.l.b16 %v223
    %v258 = vunpack.c.l.b16 %v224
    %v259 = vunpack.c.l.b16 %v225
    %v260 = vunpack.c.l.b16 %v226
    %v261 = vunpack.c.l.b16 %v227
    %v262 = vunpack.c.l.b16 %v228
    %v263 = vunpack.c.l.b16 %v229
    %v264 = vunpack.c.l.b16 %v230
    %v265 = vunpack.c.l.b16 %v231
    %v266 = vunpack.c.l.b16 %v232
    %v267 = vunpack.c.l.b16 %v233
    %v268 = vunpack.c.l.b16 %v234
    %v269 = vunpack.c.l.b16 %v235
    %v270 = vpack.c.b16 %v255, %v254
    %v271 = vpack.c.b16 %v257, %v256
    %v272 = vpack.c.b16 %v259, %v258
    %v273 = vpack.c.b16 %v261, %v260
    %v274 = vpack.c.b16 %v263, %v262
    %v275 = vpack.c.b16 %v265, %v264
    %v276 = vpack.c.b16 %v267, %v266
    %v277 = vpack.c.b16 %v269, %v268
    %286 = vmatpush.bf16.msra.mxu0 %v277
    %287 = vmatpush.bf16.msra.mxu0 %v276
    %288 = vmatpush.bf16.msra.mxu0 %v275
    %289 = vmatpush.bf16.msra.mxu0 %v274
    %290 = vmatpush.bf16.msra.mxu0 %v273
    %291 = vmatpush.bf16.msra.mxu0 %v272
    %292 = vmatpush.bf16.msra.mxu0 %v271
    %293 = vmatpush.bf16.msra.mxu0 %v270
    %294 = vmatmul.bf16.gmra.mxu0 %v219
    %v295 = vpop.f32.mrf.mxu0
    %v296 = vadd.f32 %v237, %v295
    %v297 = vpop.f32.mrf.mxu0
    %298 = vdwg.mxu0
    %v299 = vmax.f32 %v296, 0.0
    %v300 = vpack.c.bf16 %v299, %v299
    %v301 = vld [vmem:[#allocation6 + $0x94] sm:$0xf]
    %v302 = vld [vmem:[#allocation6 + $0x98] sm:$0xf]
    %v303 = vld [vmem:[#allocation6 + $0x9c] sm:$0xf]
    %v304 = vld [vmem:[#allocation6 + $0xa0] sm:$0xf]
    %v305 = vld [vmem:[#allocation6 + $0xa4] sm:$0xf]
    %v306 = vld [vmem:[#allocation6 + $0xa8] sm:$0xf]
    %v307 = vld [vmem:[#allocation6 + $0xac] sm:$0xf]
    %v308 = vld [vmem:[#allocation6 + $0xb0] sm:$0xf]
    %v309 = vld [vmem:[#allocation6 + $0xb4] sm:$0xf]
    %v310 = vld [vmem:[#allocation6 + $0xb8] sm:$0xf]
    %v311 = vld [vmem:[#allocation6 + $0xbc] sm:$0xf]
    %v312 = vld [vmem:[#allocation6 + $0xc0] sm:$0xf]
    %v313 = vld [vmem:[#allocation6 + $0xc4] sm:$0xf]
    %v314 = vld [vmem:[#allocation6 + $0xc8] sm:$0xf]
    %v315 = vld [vmem:[#allocation6 + $0xcc] sm:$0xf]
    %v316 = vld [vmem:[#allocation6 + $0xd0] sm:$0xf]
    %v317 = vld [vmem:[#allocation7 + $0x3] sm:$0x1]
    %v318 = vperm.slane %v317, 0
    %v335 = vunpack.c.l.b16 %v301
    %v336 = vunpack.c.l.b16 %v302
    %v337 = vunpack.c.l.b16 %v303
    %v338 = vunpack.c.l.b16 %v304
    %v339 = vunpack.c.l.b16 %v305
    %v340 = vunpack.c.l.b16 %v306
    %v341 = vunpack.c.l.b16 %v307
    %v342 = vunpack.c.l.b16 %v308
    %v343 = vunpack.c.l.b16 %v309
    %v344 = vunpack.c.l.b16 %v310
    %v345 = vunpack.c.l.b16 %v311
    %v346 = vunpack.c.l.b16 %v312
    %v347 = vunpack.c.l.b16 %v313
    %v348 = vunpack.c.l.b16 %v314
    %v349 = vunpack.c.l.b16 %v315
    %v350 = vunpack.c.l.b16 %v316
    %v351 = vpack.c.b16 %v336, %v335
    %v352 = vpack.c.b16 %v338, %v337
    %v353 = vpack.c.b16 %v340, %v339
    %v354 = vpack.c.b16 %v342, %v341
    %v355 = vpack.c.b16 %v344, %v343
    %v356 = vpack.c.b16 %v346, %v345
    %v357 = vpack.c.b16 %v348, %v347
    %v358 = vpack.c.b16 %v350, %v349
    %367 = vmatpush.bf16.msra.mxu0 %v358
    %368 = vmatpush.bf16.msra.mxu0 %v357
    %369 = vmatpush.bf16.msra.mxu0 %v356
    %370 = vmatpush.bf16.msra.mxu0 %v355
    %371 = vmatpush.bf16.msra.mxu0 %v354
    %372 = vmatpush.bf16.msra.mxu0 %v353
    %373 = vmatpush.bf16.msra.mxu0 %v352
    %374 = vmatpush.bf16.msra.mxu0 %v351
    %375 = vmatmul.bf16.gmra.mxu0 %v300
    %v376 = vpop.f32.mrf.mxu0
    %v377 = vadd.f32 %v318, %v376
    %v378 = vpop.f32.mrf.mxu0
    %379 = vdwg.mxu0
    %v380 = vmax.f32 %v377, 0.0
    %v381 = vpack.c.bf16 %v380, %v380
    %v382 = vld [vmem:[#allocation6 + $0xd4] sm:$0xf]
    %v383 = vld [vmem:[#allocation6 + $0xd8] sm:$0xf]
    %v384 = vld [vmem:[#allocation6 + $0xdc] sm:$0xf]
    %v385 = vld [vmem:[#allocation6 + $0xe0] sm:$0xf]
    %v386 = vld [vmem:[#allocation6 + $0xe4] sm:$0xf]
    %v387 = vld [vmem:[#allocation6 + $0xe8] sm:$0xf]
    %v388 = vld [vmem:[#allocation6 + $0xec] sm:$0xf]
    %v389 = vld [vmem:[#allocation6 + $0xf0] sm:$0xf]
    %v390 = vld [vmem:[#allocation6 + $0xf4] sm:$0xf]
    %v391 = vld [vmem:[#allocation6 + $0xf8] sm:$0xf]
    %v392 = vld [vmem:[#allocation6 + $0xfc] sm:$0xf]
    %v393 = vld [vmem:[#allocation6 + $0x100] sm:$0xf]
    %v394 = vld [vmem:[#allocation6 + $0x104] sm:$0xf]
    %v395 = vld [vmem:[#allocation6 + $0x108] sm:$0xf]
    %v396 = vld [vmem:[#allocation6 + $0x10c] sm:$0xf]
    %v397 = vld [vmem:[#allocation6 + $0x110] sm:$0xf]
    %v398 = vld [vmem:[#allocation7 + $0x4] sm:$0x1]
    %v399 = vperm.slane %v398, 0
    %v416 = vunpack.c.l.b16 %v382
    %v417 = vunpack.c.l.b16 %v383
    %v418 = vunpack.c.l.b16 %v384
    %v419 = vunpack.c.l.b16 %v385
    %v420 = vunpack.c.l.b16 %v386
    %v421 = vunpack.c.l.b16 %v387
    %v422 = vunpack.c.l.b16 %v388
    %v423 = vunpack.c.l.b16 %v389
    %v424 = vunpack.c.l.b16 %v390
    %v425 = vunpack.c.l.b16 %v391
    %v426 = vunpack.c.l.b16 %v392
    %v427 = vunpack.c.l.b16 %v393
    %v428 = vunpack.c.l.b16 %v394
    %v429 = vunpack.c.l.b16 %v395
    %v430 = vunpack.c.l.b16 %v396
    %v431 = vunpack.c.l.b16 %v397
    %v432 = vpack.c.b16 %v417, %v416
    %v433 = vpack.c.b16 %v419, %v418
    %v434 = vpack.c.b16 %v421, %v420
    %v435 = vpack.c.b16 %v423, %v422
    %v436 = vpack.c.b16 %v425, %v424
    %v437 = vpack.c.b16 %v427, %v426
    %v438 = vpack.c.b16 %v429, %v428
    %v439 = vpack.c.b16 %v431, %v430
    %448 = vmatpush.bf16.msra.mxu0 %v439
    %449 = vmatpush.bf16.msra.mxu0 %v438
    %450 = vmatpush.bf16.msra.mxu0 %v437
    %451 = vmatpush.bf16.msra.mxu0 %v436
    %452 = vmatpush.bf16.msra.mxu0 %v435
    %453 = vmatpush.bf16.msra.mxu0 %v434
    %454 = vmatpush.bf16.msra.mxu0 %v433
    %455 = vmatpush.bf16.msra.mxu0 %v432
    %456 = vmatmul.bf16.gmra.mxu0 %v381
    %v457 = vpop.f32.mrf.mxu0
    %v458 = vadd.f32 %v399, %v457
    %v459 = vpop.f32.mrf.mxu0
    %460 = vdwg.mxu0
    %v461 = vpack.c.bf16 %v458, %v458
    %462 = vst [vmem:[%s4] sm:$0xf] %v461
    // Predicated region
    $region34: #{forward.1} parent=1 // pred_check
      _
    $region35: #{forward.1} parent=1 // pred_check_branch
      %464 = sbr.rel (0) target = $region37
    $region36: #{forward.1} parent=1 // pred_region
      _
    $region37: #{forward.1} parent=1 // pred_fallthru
      _
    // Predicated region
    $region38: #{forward.1} parent=1 // pred_check
      _
    $region39: #{forward.1} parent=1 // pred_check_branch
      %466 = sbr.rel (0) target = $region41
    $region40: #{forward.1} parent=1 // pred_region
      _
    $region41: #{forward.1} parent=1 // pred_fallthru
      _
    %467 = vsyncpa [#allocation3], 1
    %468 = vsyncpa [#allocation5], 1
    %469 = vsyncpa [#allocation8], 1

</llo_original>
